<compile_context>
chip_gen: v6e
topology: v6e:2x2x1
jax: 0.10.0
libtpu: 0.0.40
codegen_flags: <defaults>
</compile_context>

<pallas_src>
import jax
import jax.numpy as jnp
from jax import lax
from jax.experimental import pallas as pl
from jax.experimental.pallas import tpu as pltpu

LANES = 128
SUBLANES = 8
TILE_GRANULE = 32          # multi-block tile_rows granularity: valid for f32/bf16/int8
DEFAULT_MAX_TILE_ROWS = 8192  # 4 MiB f32 / 2 MiB bf16 per input block


def _cdiv(a, b):
    return -(-a // b)


def _round_up(a, b):
    return _cdiv(a, b) * b


class ContentLoss:
    """JAX/Pallas port of the PyTorch ContentLoss module."""

    def __init__(self, target, weight, max_tile_rows: int = DEFAULT_MAX_TILE_ROWS):
        # Keep the target in its native dtype (bf16 stays bf16 -> half the HBM
        # bytes streamed); all arithmetic is done in f32 inside the kernel.
        self.target = jnp.asarray(target)
        self.weight = float(weight)
        self.loss = None

        n = int(self.target.size)
        assert n > 0

        max_tile_rows = max(TILE_GRANULE, (int(max_tile_rows) // TILE_GRANULE) * TILE_GRANULE)

        rows = _cdiv(n, LANES)  # lane-dense row count of the flat feature map
        if rows > max_tile_rows:
            # Multi-block streaming path.  Only lane-pad (n -> rows*128); the
            # sublane-ragged final grid block is handled by an in-kernel mask
            # gated to the last step, so no per-forward full-array pad copy is
            # needed when n is already a multiple of 128 (typical VGG maps).
            padded_rows = rows
            tile_rows = max_tile_rows
            num_blocks = _cdiv(rows, tile_rows)
            if num_blocks % 2 == 1:
                # Even block count -> balanced split across v7x's 2 TensorCores.
                cand = _round_up(_cdiv(rows, num_blocks + 1), TILE_GRANULE)
                if cand >= TILE_GRANULE and _cdiv(rows, cand) % 2 == 0:
                    tile_rows = cand
                    num_blocks = _cdiv(rows, tile_rows)
            mask_last = (rows % tile_rows) != 0
        else:
            # Single block: whole (sublane-padded) slab resident in VMEM.
            padded_rows = _round_up(rows, SUBLANES)
            tile_rows = padded_rows
            num_blocks = 1
            mask_last = False

        pad_elems = padded_rows * LANES - n  # 0 whenever n % 128 == 0 (multi-block)

        self._n = n
        self._rows = rows
        self._padded_rows = padded_rows
        self._tile_rows = tile_rows
        self._num_blocks = num_blocks
        self._mask_last = mask_last
        self._pad_elems = pad_elems

        # Pre-pad / reshape the constant target once (native dtype, zero pad so
        # padded positions of x and target agree and contribute 0 to the loss).
        t_flat = self.target.reshape(-1)
        if pad_elems:
            t_flat = jnp.pad(t_flat, (0, pad_elems))
        self._t2d = t_flat.reshape(padded_rows, LANES)

        # pallas_call is built lazily per x-dtype (native-dtype streaming).
        self._compute_cache = {}

    # ------------------------------------------------------------------ build
    def _build_compute(self, x_dtype):
        tile_rows = self._tile_rows
        num_blocks = self._num_blocks
        padded_rows = self._padded_rows
        pad_elems = self._pad_elems
        mask_last = self._mask_last
        valid_rows = self._rows
        sub_tiles = tile_rows // SUBLANES

        def kernel(x_ref, t_ref, out_ref):
            # Cast to f32 *inside* the kernel; inputs stream in native dtype.
            d = x_ref[...].astype(jnp.float32) - t_ref[...].astype(jnp.float32)
            sq = d * d
            # (tile_rows,128) -> (tile_rows//8, 8, 128) is tile-aligned (free
            # view); axis-0 sum is pure vreg-wise VPU adds -> (8,128) partial.
            out_ref[0] = jnp.sum(sq.reshape(sub_tiles, SUBLANES, LANES), axis=0)
            if mask_last:
                # Tail mask only on the LAST grid step (ragged boundary block
                # contains unspecified rows beyond `valid_rows`); all other
                # steps stay at the HBM roofline with zero extra VALU work.
                i = pl.program_id(0)

                @pl.when(i == pl.num_programs(0) - 1)
                def _():
                    row = (lax.broadcasted_iota(jnp.int32, (tile_rows, LANES), 0)
                           + i * tile_rows)
                    sq_m = jnp.where(row < valid_rows, sq, 0.0)
                    out_ref[0] = jnp.sum(
                        sq_m.reshape(sub_tiles, SUBLANES, LANES), axis=0)

        # Explicit VMEM budget: double-buffered native-dtype inputs + f32
        # temporaries (casts / diff / square) + slack.  ~36 MiB for the default
        # f32 geometry -> fits v7x's 64 MiB with headroom.
        blk = tile_rows * LANES
        x_bytes = blk * jnp.dtype(x_dtype).itemsize
        t_bytes = blk * jnp.dtype(self._t2d.dtype).itemsize
        vmem_limit = int(2 * (x_bytes + t_bytes) + 4 * blk * 4 + (4 << 20))
        vmem_limit = max(vmem_limit, 16 << 20)

        partial_fn = pl.pallas_call(
            kernel,
            out_shape=jax.ShapeDtypeStruct((num_blocks, SUBLANES, LANES), jnp.float32),
            grid_spec=pltpu.PrefetchScalarGridSpec(
                num_scalar_prefetch=0,
                grid=(num_blocks,),
                in_specs=[
                    pl.BlockSpec((tile_rows, LANES), lambda i: (i, 0)),
                    pl.BlockSpec((tile_rows, LANES), lambda i: (i, 0)),
                ],
                out_specs=pl.BlockSpec((1, SUBLANES, LANES), lambda i: (i, 0, 0)),
            ),
            compiler_params=pltpu.CompilerParams(
                # Each step writes its own partial-sum block -> no carried
                # state, so the axis is truly parallel (2-TC split on v7x).
                dimension_semantics=("parallel",),
                vmem_limit_bytes=vmem_limit,
            ),
        )

        scale = self.weight / float(self._n)

        def _compute(x, t2d):
            x_flat = x.reshape(-1)  # native dtype, free view for contiguous x
            if pad_elems:
                # Only taken for lane-ragged sizes (n % 128 != 0) or small
                # sublane-ragged single-block slabs; typical aligned feature
                # maps skip this copy entirely.
                x_flat = jnp.pad(x_flat, (0, pad_elems))
            x2d = x_flat.reshape(padded_rows, LANES)
            partials = partial_fn(x2d, t2d)
            # Single cross-lane reduce over a few KiB + weight * 1/N scale.
            return jnp.sum(partials) * scale

        return jax.jit(_compute)

    # ---------------------------------------------------------------- forward
    def forward(self, x):
        x = jnp.asarray(x)
        assert x.shape == self.target.shape
        key = str(jnp.dtype(x.dtype))
        fn = self._compute_cache.get(key)
        if fn is None:
            fn = self._build_compute(x.dtype)
            self._compute_cache[key] = fn
        self.loss = fn(x, self._t2d)
        # Matches PyTorch ContentLoss.forward: input passes through unchanged.
        return x

    __call__ = forward


def _reference_loss(x, target, weight):
    d = x.astype(jnp.float32) - target.astype(jnp.float32)
    return weight * jnp.mean(d * d)


if __name__ == "__main__":
    key = jax.random.PRNGKey(0)
    k1, k2, k3, k4, k5, k6 = jax.random.split(key, 6)

    # Case 1: aligned f32 NCHW feature map (single block, no pad, no mask).
    B, C, H, W = 2, 4, 16, 16
    weight = 0.75
    target = jax.random.normal(k1, (B, C, H, W), dtype=jnp.float32)
    x = jax.random.normal(k2, (B, C, H, W), dtype=jnp.float32)

    module = ContentLoss(target, weight)
    out = module(x)
    jax.block_until_ready(out)
    jax.block_until_ready(module.loss)
    ref = _reference_loss(x, target, weight)
    assert out.shape == x.shape
    assert jnp.allclose(out, x)
    assert jnp.allclose(module.loss, ref, rtol=1e-5, atol=1e-6), (module.loss, ref)

    # Case 2: bf16 feature map streamed in native dtype, f32 math in-kernel.
    tb = jax.random.normal(k3, (B, C, H, W), dtype=jnp.float32).astype(jnp.bfloat16)
    xb = jax.random.normal(k4, (B, C, H, W), dtype=jnp.float32).astype(jnp.bfloat16)
    module_b = ContentLoss(tb, 0.5)
    out_b = module_b(xb)
    jax.block_until_ready(out_b)
    jax.block_until_ready(module_b.loss)
    ref_b = _reference_loss(xb, tb, 0.5)
    assert out_b.dtype == jnp.bfloat16 and jnp.allclose(out_b, xb)
    assert jnp.allclose(module_b.loss, ref_b, rtol=1e-4, atol=1e-6), (module_b.loss, ref_b)

    # Case 3: ragged size forcing the multi-block path with a masked (gated)
    # tail block and an even block count (small max_tile_rows for test only).
    shape3 = (1, 3, 40, 40)   # 4800 elems -> 38 lane-rows, 2 blocks of 32 rows
    t3 = jax.random.normal(k5, shape3, dtype=jnp.float32)
    x3 = jax.random.normal(k6, shape3, dtype=jnp.float32)
    module3 = ContentLoss(t3, 0.3, max_tile_rows=32)
    out3 = module3(x3)
    jax.block_until_ready(out3)
    jax.block_until_ready(module3.loss)
    ref3 = _reference_loss(x3, t3, 0.3)
    assert jnp.allclose(module3.loss, ref3, rtol=1e-5, atol=1e-6), (module3.loss, ref3)

    print("KERNEL_OK")
</pallas_src>

<mosaic_0001>
module attributes {stable_mosaic.version = 11 : i64} {
  func.func @kernel(%arg0: i32, %arg1: memref<16x128xf32, #tpu.memory_space<vmem>>, %arg2: memref<16x128xf32, #tpu.memory_space<vmem>>, %arg3: memref<1x8x128xf32, #tpu.memory_space<vmem>>) attributes {dimension_semantics = [#tpu.dimension_semantics<parallel>], iteration_bounds = array<i64: 1>, scalar_prefetch = 0 : i64, scratch_operands = 0 : i64, tpu.core_type = #tpu.core_type<tc>, window_params = [{transform_indices = @transform_0, window_bounds = array<i64: 16, 128>}, {transform_indices = @transform_1, window_bounds = array<i64: 16, 128>}, {transform_indices = @transform_2, window_bounds = array<i64: 1, 8, 128>}]} {
    %c0 = arith.constant 0 : index
    %c0_0 = arith.constant 0 : index
    %0 = vector.load %arg1[%c0, %c0_0] : memref<16x128xf32, #tpu.memory_space<vmem>>, vector<16x128xf32>
    %c0_1 = arith.constant 0 : index
    %c0_2 = arith.constant 0 : index
    %1 = vector.load %arg2[%c0_1, %c0_2] : memref<16x128xf32, #tpu.memory_space<vmem>>, vector<16x128xf32>
    %2 = arith.subf %0, %1 : vector<16x128xf32>
    %3 = arith.mulf %2, %2 : vector<16x128xf32>
    %4 = vector.shape_cast %3 : vector<16x128xf32> to vector<2x8x128xf32>
    %cst = arith.constant dense<0.000000e+00> : vector<8x128xf32>
    %5 = vector.multi_reduction <add>, %4, %cst [0] : vector<2x8x128xf32> to vector<8x128xf32>
    %c0_3 = arith.constant 0 : index
    %c0_4 = arith.constant 0 : index
    %c0_5 = arith.constant 0 : index
    %6 = vector.load %arg3[%c0_3, %c0_4, %c0_5] : memref<1x8x128xf32, #tpu.memory_space<vmem>>, vector<1x8x128xf32>
    %7 = vector.shape_cast %6 : vector<1x8x128xf32> to vector<8x128xf32>
    %8 = vector.shape_cast %5 : vector<8x128xf32> to vector<1x8x128xf32>
    tpu.vector_store %arg3[%c0_3, %c0_4, %c0_5], %8 {strides = array<i32>} : memref<1x8x128xf32, #tpu.memory_space<vmem>>, vector<1x8x128xf32>,
    return
  }
  func.func @transform_0(%arg0: i32) -> (i32, i32) {
    %c0_i32 = arith.constant 0 : i32
    %c0_i32_0 = arith.constant 0 : i32
    return %arg0, %c0_i32 : i32, i32
  }
  func.func @transform_1(%arg0: i32) -> (i32, i32) {
    %c0_i32 = arith.constant 0 : i32
    %c0_i32_0 = arith.constant 0 : i32
    return %arg0, %c0_i32 : i32, i32
  }
  func.func @transform_2(%arg0: i32) -> (i32, i32, i32) {
    %c0_i32 = arith.constant 0 : i32
    %c0_i32_0 = arith.constant 0 : i32
    %c0_i32_1 = arith.constant 0 : i32
    return %arg0, %c0_i32, %c0_i32_0 : i32, i32, i32
  }
}

</mosaic_0001>

<llo_original>
// kernel: _compute.1
$region0: #{_compute.1}
  #allocation0 [shape = 'u32[]', space=smem, size = 0x4, offset = 0x4, fixed_abs, tag = 'smem constant byte address 0x4 - core index']
  #allocation1 [shape = 'u32[144,128]{1,0:T(1,128)}', space=vmem, size = 0x12000, scoped, tag = 'internal scratch']
  %s0 = inlined_call_operand.vmem [shape: f32[16,128], index: 0, kind: input, shape index: {}]
  %s1 = inlined_call_operand.vmem [shape: f32[16,128], index: 1, kind: input, shape index: {}]
  %s2 = inlined_call_operand.vmem [shape: f32[1,8,128], index: 2, kind: output, shape index: {}]
  %s3 = sld [smem:[#allocation0]]
  $region18: #{_compute.1} parent=0
    _
  %s5 = ssub.s32 1, %s3
  %s6 = scalar_select 0, %s5, %s3
  // Predicated region
  $region2: #{_compute.1} parent=0 // pred_check
    _
  $region3: #{_compute.1} parent=0 // pred_check_branch
    %8 = sbr.rel (0) target = $region5
  $region4: #{_compute.1} parent=0 // pred_region
    _
  $region5: #{_compute.1} parent=0 // pred_fallthru
    _
  // Predicated region
  $region6: #{_compute.1} parent=0 // pred_check
    _
  $region7: #{_compute.1} parent=0 // pred_check_branch
    %10 = sbr.rel (0) target = $region9
  $region8: #{_compute.1} parent=0 // pred_region
    _
  $region9: #{_compute.1} parent=0 // pred_fallthru
    _
  %v11 = vld [vmem:[%s0] sm:$0xff]
  %v12 = vld [vmem:[%s0 + $0x8] sm:$0xff]
  %v13 = vld [vmem:[%s1] sm:$0xff]
  %v14 = vld [vmem:[%s1 + $0x8] sm:$0xff]
  %v15 = vsub.f32 %v11, %v13
  %v16 = vsub.f32 %v12, %v14
  %v17 = vmul.f32 %v15, %v15
  %v18 = vmul.f32 %v16, %v16
  %v19 = vadd.f32 %v17, %v18
  %20 = vst [vmem:[%s2] sm:$0xff] %v19
  // Predicated region
  $region10: #{_compute.1} parent=0 // pred_check
    _
  $region11: #{_compute.1} parent=0 // pred_check_branch
    %22 = sbr.rel (0) target = $region13
  $region12: #{_compute.1} parent=0 // pred_region
    _
  $region13: #{_compute.1} parent=0 // pred_fallthru
    _
  // Predicated region
  $region14: #{_compute.1} parent=0 // pred_check
    _
  $region15: #{_compute.1} parent=0 // pred_check_branch
    %24 = sbr.rel (0) target = $region17
  $region16: #{_compute.1} parent=0 // pred_region
    _
  $region17: #{_compute.1} parent=0 // pred_fallthru
    _

</llo_original>
